<compile_context>
chip_gen: v7x
topology: tpu7x:2x2x1
jax: 0.10.0
libtpu: 0.0.40
codegen_flags: <defaults>
</compile_context>

<pallas_src>
import math
import functools

import jax
import jax.numpy as jnp
from jax.experimental import pallas as pl
from jax.experimental.pallas import tpu as pltpu


def _round_up(n, m):
    return (n + m - 1) // m * m


def _mlp_kernel(x_ref, w1_ref, b1_ref, w2_ref, b2_ref, w3_ref, b3_ref, o_ref,
                *, inv_sqrt_d, inv_sqrt_w, out_scale):
    # Layer 1: StdLinear(D, width) -> ReLU.  f32 inputs, f32 accumulation.
    h = jnp.dot(x_ref[...], w1_ref[...], preferred_element_type=jnp.float32)
    h = jnp.maximum((h + b1_ref[...]) * inv_sqrt_d, 0.0)

    # Layer 2: StdLinear(width, width) -> ReLU (K = width is tiny; f32).
    h = jnp.dot(h, w2_ref[...], preferred_element_type=jnp.float32)
    h = jnp.maximum((h + b2_ref[...]) * inv_sqrt_w, 0.0)

    # Layer 3: FinalLinear(width, num_classes); /width and /gamma0 folded
    # into out_scale.  Output tile is lane-dense (classes padded to 128).
    h = jnp.dot(h, w3_ref[...], preferred_element_type=jnp.float32)
    o_ref[...] = ((h + b3_ref[...]) * out_scale).astype(o_ref.dtype)


def init_mlp_params(key, D, width=32, depth=3, num_classes=10):
    """Deterministic parameter init matching the PyTorch module:
    weights ~ N(0,1), biases = 0. Weights stored as (in, out) (pre-transposed)."""
    assert depth == 3, "This script builds the depth=3 configuration."
    k1, k2, k3 = jax.random.split(key, 3)
    return {
        "w1": jax.random.normal(k1, (D, width), jnp.float32),
        "b1": jnp.zeros((1, width), jnp.float32),
        "w2": jax.random.normal(k2, (width, width), jnp.float32),
        "b2": jnp.zeros((1, width), jnp.float32),
        "w3": jax.random.normal(k3, (width, num_classes), jnp.float32),
        "b3": jnp.zeros((1, num_classes), jnp.float32),
    }


def mlp_forward(x_nchw, params, gamma0=1.0, block_b=1024):
    B = x_nchw.shape[0]
    x = x_nchw.reshape(B, -1)                 # torch.flatten(x, 1)
    D = x.shape[-1]
    width = params["w1"].shape[1]
    num_classes = params["w3"].shape[1]

    # --- layout plumbing -------------------------------------------------
    # Lane-dense output: pad classes to a multiple of 128 lanes.
    nc_pad = _round_up(num_classes, 128)
    # Batch: pad to a multiple of 8 sublanes (f32), then to the batch tile.
    b8 = _round_up(max(B, 8), 8)
    tb = _round_up(min(block_b, b8), 8)       # batch tile (rows per grid step)
    # v7x megacore: if the whole batch would be a single block but is big
    # enough to split, halve the tile so both TensorCores get work.  This
    # also minimizes padding when B is not tile-aligned.
    if b8 >= 16 and b8 // tb < 2:
        tb = _round_up(pl.cdiv(b8, 2), 8)
    b_pad = _round_up(b8, tb)
    n_blocks = b_pad // tb

    # No dtype conversion pass: f32 x goes straight into the kernel.  Only a
    # batch pad is applied (and only if B isn't already tile-aligned).
    x_in = x
    if b_pad != B:
        x_in = jnp.pad(x_in, ((0, b_pad - B), (0, 0)))
    w3 = jnp.pad(params["w3"], ((0, 0), (0, nc_pad - num_classes)))
    b3 = jnp.pad(params["b3"], ((0, 0), (0, nc_pad - num_classes)))

    kernel = functools.partial(
        _mlp_kernel,
        inv_sqrt_d=1.0 / math.sqrt(D),
        inv_sqrt_w=1.0 / math.sqrt(width),
        out_scale=1.0 / (float(width) * float(gamma0)),
    )

    const = lambda *s: pl.BlockSpec(s, lambda i: tuple(0 for _ in s))

    out = pl.pallas_call(
        kernel,
        out_shape=jax.ShapeDtypeStruct((b_pad, nc_pad), jnp.float32),
        grid=(n_blocks,),
        in_specs=[
            pl.BlockSpec((tb, D), lambda i: (i, 0)),   # x  (blocked on batch)
            const(D, width),                           # w1 (VMEM-resident)
            const(1, width),                           # b1
            const(width, width),                       # w2
            const(1, width),                           # b2
            const(width, nc_pad),                      # w3 (lane-padded)
            const(1, nc_pad),                          # b3 (lane-padded)
        ],
        out_specs=pl.BlockSpec((tb, nc_pad), lambda i: (i, 0)),
        compiler_params=pltpu.CompilerParams(
            dimension_semantics=("parallel",),         # megacore-shardable
            vmem_limit_bytes=32 << 20,                 # fits tb=2048 f32 tiles
        ),
    )(x_in, params["w1"], params["b1"], params["w2"], params["b2"], w3, b3)

    return out[:B, :num_classes]


def mlp_reference(x_nchw, params, gamma0=1.0, precision=None):
    """Pure-JAX reference mirroring the PyTorch forward.
    precision=None matches the kernel's default-precision f32 MXU matmuls;
    precision=HIGHEST gives the full-fidelity f32 result."""
    B = x_nchw.shape[0]
    x = x_nchw.reshape(B, -1).astype(jnp.float32)
    D = x.shape[-1]
    width = params["w1"].shape[1]
    h = jnp.dot(x, params["w1"], preferred_element_type=jnp.float32,
                precision=precision)
    h = jnp.maximum((h + params["b1"]) / math.sqrt(D), 0.0)
    h = jnp.dot(h, params["w2"], preferred_element_type=jnp.float32,
                precision=precision)
    h = jnp.maximum((h + params["b2"]) / math.sqrt(width), 0.0)
    h = jnp.dot(h, params["w3"], preferred_element_type=jnp.float32,
                precision=precision)
    h = (h + params["b3"]) / width
    return h / gamma0


if __name__ == "__main__":
    key = jax.random.PRNGKey(0)
    k_x, k_p = jax.random.split(key)

    # Small shapes consistent with the module: NCHW image input flattened to D.
    B, C, H, W = 2, 4, 16, 16
    D = C * H * W            # 1024
    width, depth, num_classes, gamma0 = 32, 3, 10, 1.0

    x = jax.random.normal(k_x, (B, C, H, W), jnp.float32)
    params = init_mlp_params(k_p, D, width=width, depth=depth,
                             num_classes=num_classes)

    out = mlp_forward(x, params, gamma0=gamma0)
    out = jax.block_until_ready(out)
    assert out.shape == (B, num_classes)

    # Tight check vs. a reference using the same default-precision f32 dots.
    ref_def = mlp_reference(x, params, gamma0=gamma0, precision=None)
    assert jnp.allclose(out, ref_def, atol=2e-3, rtol=2e-3), \
        "mismatch vs default-precision f32 reference"

    # Semantic-fidelity check vs. the full-precision PyTorch-equivalent
    # reference (tolerance covers TPU's default f32 matmul precision).
    ref_hi = mlp_reference(x, params, gamma0=gamma0,
                           precision=jax.lax.Precision.HIGHEST)
    assert jnp.allclose(out, ref_hi, atol=2e-2, rtol=2e-2), \
        "mismatch vs HIGHEST-precision f32 reference"

    print("KERNEL_OK")
</pallas_src>

<mosaic_0001>
module attributes {stable_mosaic.version = 11 : i64} {
  func.func @_mlp_kernel(%arg0: i32, %arg1: memref<8x1024xf32, #tpu.memory_space<vmem>>, %arg2: memref<1024x32xf32, #tpu.memory_space<vmem>>, %arg3: memref<1x32xf32, #tpu.memory_space<vmem>>, %arg4: memref<32x32xf32, #tpu.memory_space<vmem>>, %arg5: memref<1x32xf32, #tpu.memory_space<vmem>>, %arg6: memref<32x128xf32, #tpu.memory_space<vmem>>, %arg7: memref<1x128xf32, #tpu.memory_space<vmem>>, %arg8: memref<8x128xf32, #tpu.memory_space<vmem>>) attributes {dimension_semantics = [#tpu.dimension_semantics<parallel>], iteration_bounds = array<i64: 1>, scalar_prefetch = 0 : i64, scratch_operands = 0 : i64, tpu.core_type = #tpu.core_type<tc>, window_params = [{transform_indices = @transform_0, window_bounds = array<i64: 8, 1024>}, {pipeline_mode = #tpu.pipeline_mode<synchronous>, transform_indices = @transform_1, window_bounds = array<i64: 1024, 32>}, {pipeline_mode = #tpu.pipeline_mode<synchronous>, transform_indices = @transform_2, window_bounds = array<i64: 1, 32>}, {pipeline_mode = #tpu.pipeline_mode<synchronous>, transform_indices = @transform_3, window_bounds = array<i64: 32, 32>}, {pipeline_mode = #tpu.pipeline_mode<synchronous>, transform_indices = @transform_4, window_bounds = array<i64: 1, 32>}, {pipeline_mode = #tpu.pipeline_mode<synchronous>, transform_indices = @transform_5, window_bounds = array<i64: 32, 128>}, {pipeline_mode = #tpu.pipeline_mode<synchronous>, transform_indices = @transform_6, window_bounds = array<i64: 1, 128>}, {transform_indices = @transform_7, window_bounds = array<i64: 8, 128>}]} {
    %c0 = arith.constant 0 : index
    %c0_0 = arith.constant 0 : index
    %0 = vector.load %arg1[%c0, %c0_0] : memref<8x1024xf32, #tpu.memory_space<vmem>>, vector<8x1024xf32>
    %c0_1 = arith.constant 0 : index
    %c0_2 = arith.constant 0 : index
    %1 = vector.load %arg2[%c0_1, %c0_2] : memref<1024x32xf32, #tpu.memory_space<vmem>>, vector<1024x32xf32>
    %cst = arith.constant dense<0.000000e+00> : vector<8x32xf32>
    %2 = tpu.matmul %0, %1, %cst {dimension_numbers = #tpu.dot_dimension_numbers<[1], [0], [0], [1], [0, 0, 1, 1], [], []>} : vector<8x1024xf32>, vector<1024x32xf32>, vector<8x32xf32> -> vector<8x32xf32>
    %c0_3 = arith.constant 0 : index
    %c0_4 = arith.constant 0 : index
    %3 = vector.load %arg3[%c0_3, %c0_4] : memref<1x32xf32, #tpu.memory_space<vmem>>, vector<1x32xf32>
    %4 = vector.broadcast %3 : vector<1x32xf32> to vector<8x32xf32>
    %5 = arith.addf %2, %4 : vector<8x32xf32>
    %cst_5 = arith.constant 3.125000e-02 : f32
    %6 = vector.broadcast %cst_5 : f32 to vector<8x32xf32>
    %7 = arith.mulf %5, %6 : vector<8x32xf32>
    %cst_6 = arith.constant 0.000000e+00 : f32
    %8 = vector.broadcast %cst_6 : f32 to vector<8x32xf32>
    %9 = arith.maximumf %7, %8 : vector<8x32xf32>
    %c0_7 = arith.constant 0 : index
    %c0_8 = arith.constant 0 : index
    %10 = vector.load %arg4[%c0_7, %c0_8] : memref<32x32xf32, #tpu.memory_space<vmem>>, vector<32x32xf32>
    %cst_9 = arith.constant dense<0.000000e+00> : vector<8x32xf32>
    %11 = tpu.matmul %9, %10, %cst_9 {dimension_numbers = #tpu.dot_dimension_numbers<[1], [0], [0], [1], [0, 0, 1, 1], [], []>} : vector<8x32xf32>, vector<32x32xf32>, vector<8x32xf32> -> vector<8x32xf32>
    %c0_10 = arith.constant 0 : index
    %c0_11 = arith.constant 0 : index
    %12 = vector.load %arg5[%c0_10, %c0_11] : memref<1x32xf32, #tpu.memory_space<vmem>>, vector<1x32xf32>
    %13 = vector.broadcast %12 : vector<1x32xf32> to vector<8x32xf32>
    %14 = arith.addf %11, %13 : vector<8x32xf32>
    %cst_12 = arith.constant 0.176776692 : f32
    %15 = vector.broadcast %cst_12 : f32 to vector<8x32xf32>
    %16 = arith.mulf %14, %15 : vector<8x32xf32>
    %cst_13 = arith.constant 0.000000e+00 : f32
    %17 = vector.broadcast %cst_13 : f32 to vector<8x32xf32>
    %18 = arith.maximumf %16, %17 : vector<8x32xf32>
    %c0_14 = arith.constant 0 : index
    %c0_15 = arith.constant 0 : index
    %19 = vector.load %arg6[%c0_14, %c0_15] : memref<32x128xf32, #tpu.memory_space<vmem>>, vector<32x128xf32>
    %cst_16 = arith.constant dense<0.000000e+00> : vector<8x128xf32>
    %20 = tpu.matmul %18, %19, %cst_16 {dimension_numbers = #tpu.dot_dimension_numbers<[1], [0], [0], [1], [0, 0, 1, 1], [], []>} : vector<8x32xf32>, vector<32x128xf32>, vector<8x128xf32> -> vector<8x128xf32>
    %c0_17 = arith.constant 0 : index
    %c0_18 = arith.constant 0 : index
    %21 = vector.load %arg7[%c0_17, %c0_18] : memref<1x128xf32, #tpu.memory_space<vmem>>, vector<1x128xf32>
    %22 = vector.broadcast %21 : vector<1x128xf32> to vector<8x128xf32>
    %23 = arith.addf %20, %22 : vector<8x128xf32>
    %cst_19 = arith.constant 3.125000e-02 : f32
    %24 = vector.broadcast %cst_19 : f32 to vector<8x128xf32>
    %25 = arith.mulf %23, %24 : vector<8x128xf32>
    %c0_20 = arith.constant 0 : index
    %c0_21 = arith.constant 0 : index
    %26 = vector.load %arg8[%c0_20, %c0_21] : memref<8x128xf32, #tpu.memory_space<vmem>>, vector<8x128xf32>
    tpu.vector_store %arg8[%c0_20, %c0_21], %25 {strides = array<i32>} : memref<8x128xf32, #tpu.memory_space<vmem>>, vector<8x128xf32>,
    return
  }
  func.func @transform_0(%arg0: i32) -> (i32, i32) {
    %c0_i32 = arith.constant 0 : i32
    %c0_i32_0 = arith.constant 0 : i32
    return %arg0, %c0_i32 : i32, i32
  }
  func.func @transform_1(%arg0: i32) -> (i32, i32) {
    %c0_i32 = arith.constant 0 : i32
    %c0_i32_0 = arith.constant 0 : i32
    %c0_i32_1 = arith.constant 0 : i32
    return %c0_i32, %c0_i32_0 : i32, i32
  }
  func.func @transform_2(%arg0: i32) -> (i32, i32) {
    %c0_i32 = arith.constant 0 : i32
    %c0_i32_0 = arith.constant 0 : i32
    %c0_i32_1 = arith.constant 0 : i32
    return %c0_i32, %c0_i32_0 : i32, i32
  }
  func.func @transform_3(%arg0: i32) -> (i32, i32) {
    %c0_i32 = arith.constant 0 : i32
    %c0_i32_0 = arith.constant 0 : i32
    %c0_i32_1 = arith.constant 0 : i32
    return %c0_i32, %c0_i32_0 : i32, i32
  }
  func.func @transform_4(%arg0: i32) -> (i32, i32) {
    %c0_i32 = arith.constant 0 : i32
    %c0_i32_0 = arith.constant 0 : i32
    %c0_i32_1 = arith.constant 0 : i32
    return %c0_i32, %c0_i32_0 : i32, i32
  }
  func.func @transform_5(%arg0: i32) -> (i32, i32) {
    %c0_i32 = arith.constant 0 : i32
    %c0_i32_0 = arith.constant 0 : i32
    %c0_i32_1 = arith.constant 0 : i32
    return %c0_i32, %c0_i32_0 : i32, i32
  }
  func.func @transform_6(%arg0: i32) -> (i32, i32) {
    %c0_i32 = arith.constant 0 : i32
    %c0_i32_0 = arith.constant 0 : i32
    %c0_i32_1 = arith.constant 0 : i32
    return %c0_i32, %c0_i32_0 : i32, i32
  }
  func.func @transform_7(%arg0: i32) -> (i32, i32) {
    %c0_i32 = arith.constant 0 : i32
    %c0_i32_0 = arith.constant 0 : i32
    return %arg0, %c0_i32 : i32, i32
  }
}

</mosaic_0001>

<llo_original>
// kernel: tpu_custom_call.1
$region0: #{tpu_custom_call.1}
  #allocation0 [shape = 'u32[]', space=smem, size = 0x4, offset = 0x4, fixed_abs, tag = 'smem constant byte address 0x4 - core index']
  #allocation1 [shape = 'u32[144,128]{1,0:T(1,128)}', space=vmem, size = 0x12000, scoped, tag = 'internal scratch']
  %s0 = inlined_call_operand.vmem [shape: f32[8,1024], index: 0, kind: input, shape index: {}]
  %s1 = inlined_call_operand.vmem [shape: f32[1024,32], index: 1, kind: input, shape index: {}]
  %s2 = inlined_call_operand.vmem [shape: f32[1,32], index: 2, kind: input, shape index: {}]
  %s3 = inlined_call_operand.vmem [shape: f32[32,32], index: 3, kind: input, shape index: {}]
  %s4 = inlined_call_operand.vmem [shape: f32[1,32], index: 4, kind: input, shape index: {}]
  %s5 = inlined_call_operand.vmem [shape: f32[32,128], index: 5, kind: input, shape index: {}]
  %s6 = inlined_call_operand.vmem [shape: f32[1,128], index: 6, kind: input, shape index: {}]
  %s7 = inlined_call_operand.hbm [shape: f32[8,128], index: 7, kind: output, shape index: {}]
  %s8 = sld [smem:[#allocation0]]
  $region38: #{tpu_custom_call.1} parent=0
    _
  %s10 = ssub.s32 1, %s8
  %s11 = scalar_select 0, %s10, %s8
  $region1: #{tpu_custom_call.1} parent=0
    #allocation2 [shape = 'u8[4096]{0}', space=vmem, size = 0x1000, scoped, tag = 'output window, operand 0, single buffered']
    #allocation3 [shape = 's32[1]{0}', space=sflag, size = 0x4, scoped, tag = 'scoped memory for tpu_custom_call.1']
    %12 = vsyncpa [#allocation3], 0
    // Predicated region
    $region2: #{tpu_custom_call.1} parent=1 // pred_check
      _
    $region3: #{tpu_custom_call.1} parent=1 // pred_check_branch
      %14 = sbr.rel (0) target = $region5
    $region4: #{tpu_custom_call.1} parent=1 // pred_region
      _
    $region5: #{tpu_custom_call.1} parent=1 // pred_fallthru
      _
    // Predicated region
    $region6: #{tpu_custom_call.1} parent=1 // pred_check
      _
    $region7: #{tpu_custom_call.1} parent=1 // pred_check_branch
      %16 = sbr.rel (0) target = $region9
    $region8: #{tpu_custom_call.1} parent=1 // pred_region
      _
    $region9: #{tpu_custom_call.1} parent=1 // pred_fallthru
      _
    // Predicated region
    $region10: #{tpu_custom_call.1} parent=1 // pred_check
      _
    $region11: #{tpu_custom_call.1} parent=1 // pred_check_branch
      %18 = sbr.rel (0) target = $region13
    $region12: #{tpu_custom_call.1} parent=1 // pred_region
      _
    $region13: #{tpu_custom_call.1} parent=1 // pred_fallthru
      _
    // Predicated region
    $region14: #{tpu_custom_call.1} parent=1 // pred_check
      _
    $region15: #{tpu_custom_call.1} parent=1 // pred_check_branch
      %20 = sbr.rel (0) target = $region17
    $region16: #{tpu_custom_call.1} parent=1 // pred_region
      _
    $region17: #{tpu_custom_call.1} parent=1 // pred_fallthru
      _
    // Predicated region
    $region18: #{tpu_custom_call.1} parent=1 // pred_check
      _
    $region19: #{tpu_custom_call.1} parent=1 // pred_check_branch
      %22 = sbr.rel (0) target = $region21
    $region20: #{tpu_custom_call.1} parent=1 // pred_region
      _
    $region21: #{tpu_custom_call.1} parent=1 // pred_fallthru
      _
    // Predicated region
    $region22: #{tpu_custom_call.1} parent=1 // pred_check
      _
    $region23: #{tpu_custom_call.1} parent=1 // pred_check_branch
      %24 = sbr.rel (0) target = $region25
    $region24: #{tpu_custom_call.1} parent=1 // pred_region
      _
    $region25: #{tpu_custom_call.1} parent=1 // pred_fallthru
      _
    // Predicated region
    $region26: #{tpu_custom_call.1} parent=1 // pred_check
      _
    $region27: #{tpu_custom_call.1} parent=1 // pred_check_branch
      %26 = sbr.rel (0) target = $region29
    $region28: #{tpu_custom_call.1} parent=1 // pred_region
      _
    $region29: #{tpu_custom_call.1} parent=1 // pred_fallthru
      _
    %v27 = vld [vmem:[%s0] sm:$0xff]
    %v28 = vld [vmem:[%s0 + $0x8] sm:$0xff]
    %v29 = vld [vmem:[%s0 + $0x10] sm:$0xff]
    %v30 = vld [vmem:[%s0 + $0x18] sm:$0xff]
    %v31 = vld [vmem:[%s0 + $0x20] sm:$0xff]
    %v32 = vld [vmem:[%s0 + $0x28] sm:$0xff]
    %v33 = vld [vmem:[%s0 + $0x30] sm:$0xff]
    %v34 = vld [vmem:[%s0 + $0x38] sm:$0xff]
    %v35 = vld [vmem:[%s1] sm:$0xff]
    %v36 = vld [vmem:[%s1 + $0x8] sm:$0xff]
    %v37 = vld [vmem:[%s1 + $0x10] sm:$0xff]
    %v38 = vld [vmem:[%s1 + $0x18] sm:$0xff]
    %v39 = vld [vmem:[%s1 + $0x20] sm:$0xff]
    %v40 = vld [vmem:[%s1 + $0x28] sm:$0xff]
    %v41 = vld [vmem:[%s1 + $0x30] sm:$0xff]
    %v42 = vld [vmem:[%s1 + $0x38] sm:$0xff]
    %v43 = vld [vmem:[%s1 + $0x40] sm:$0xff]
    %v44 = vld [vmem:[%s1 + $0x48] sm:$0xff]
    %v45 = vld [vmem:[%s1 + $0x50] sm:$0xff]
    %v46 = vld [vmem:[%s1 + $0x58] sm:$0xff]
    %v47 = vld [vmem:[%s1 + $0x60] sm:$0xff]
    %v48 = vld [vmem:[%s1 + $0x68] sm:$0xff]
    %v49 = vld [vmem:[%s1 + $0x70] sm:$0xff]
    %v50 = vld [vmem:[%s1 + $0x78] sm:$0xff]
    %v51 = vld [vmem:[%s1 + $0x80] sm:$0xff]
    %v52 = vld [vmem:[%s1 + $0x88] sm:$0xff]
    %v53 = vld [vmem:[%s1 + $0x90] sm:$0xff]
    %v54 = vld [vmem:[%s1 + $0x98] sm:$0xff]
    %v55 = vld [vmem:[%s1 + $0xa0] sm:$0xff]
    %v56 = vld [vmem:[%s1 + $0xa8] sm:$0xff]
    %v57 = vld [vmem:[%s1 + $0xb0] sm:$0xff]
    %v58 = vld [vmem:[%s1 + $0xb8] sm:$0xff]
    %v59 = vld [vmem:[%s1 + $0xc0] sm:$0xff]
    %v60 = vld [vmem:[%s1 + $0xc8] sm:$0xff]
    %v61 = vld [vmem:[%s1 + $0xd0] sm:$0xff]
    %v62 = vld [vmem:[%s1 + $0xd8] sm:$0xff]
    %v63 = vld [vmem:[%s1 + $0xe0] sm:$0xff]
    %v64 = vld [vmem:[%s1 + $0xe8] sm:$0xff]
    %v65 = vld [vmem:[%s1 + $0xf0] sm:$0xff]
    %v66 = vld [vmem:[%s1 + $0xf8] sm:$0xff]
    %v67 = vld [vmem:[%s1 + $0x100] sm:$0xff]
    %v68 = vld [vmem:[%s1 + $0x108] sm:$0xff]
    %v69 = vld [vmem:[%s1 + $0x110] sm:$0xff]
    %v70 = vld [vmem:[%s1 + $0x118] sm:$0xff]
    %v71 = vld [vmem:[%s1 + $0x120] sm:$0xff]
    %v72 = vld [vmem:[%s1 + $0x128] sm:$0xff]
    %v73 = vld [vmem:[%s1 + $0x130] sm:$0xff]
    %v74 = vld [vmem:[%s1 + $0x138] sm:$0xff]
    %v75 = vld [vmem:[%s1 + $0x140] sm:$0xff]
    %v76 = vld [vmem:[%s1 + $0x148] sm:$0xff]
    %v77 = vld [vmem:[%s1 + $0x150] sm:$0xff]
    %v78 = vld [vmem:[%s1 + $0x158] sm:$0xff]
    %v79 = vld [vmem:[%s1 + $0x160] sm:$0xff]
    %v80 = vld [vmem:[%s1 + $0x168] sm:$0xff]
    %v81 = vld [vmem:[%s1 + $0x170] sm:$0xff]
    %v82 = vld [vmem:[%s1 + $0x178] sm:$0xff]
    %v83 = vld [vmem:[%s1 + $0x180] sm:$0xff]
    %v84 = vld [vmem:[%s1 + $0x188] sm:$0xff]
    %v85 = vld [vmem:[%s1 + $0x190] sm:$0xff]
    %v86 = vld [vmem:[%s1 + $0x198] sm:$0xff]
    %v87 = vld [vmem:[%s1 + $0x1a0] sm:$0xff]
    %v88 = vld [vmem:[%s1 + $0x1a8] sm:$0xff]
    %v89 = vld [vmem:[%s1 + $0x1b0] sm:$0xff]
    %v90 = vld [vmem:[%s1 + $0x1b8] sm:$0xff]
    %v91 = vld [vmem:[%s1 + $0x1c0] sm:$0xff]
    %v92 = vld [vmem:[%s1 + $0x1c8] sm:$0xff]
    %v93 = vld [vmem:[%s1 + $0x1d0] sm:$0xff]
    %v94 = vld [vmem:[%s1 + $0x1d8] sm:$0xff]
    %v95 = vld [vmem:[%s1 + $0x1e0] sm:$0xff]
    %v96 = vld [vmem:[%s1 + $0x1e8] sm:$0xff]
    %v97 = vld [vmem:[%s1 + $0x1f0] sm:$0xff]
    %v98 = vld [vmem:[%s1 + $0x1f8] sm:$0xff]
    %v99 = vld [vmem:[%s1 + $0x200] sm:$0xff]
    %v100 = vld [vmem:[%s1 + $0x208] sm:$0xff]
    %v101 = vld [vmem:[%s1 + $0x210] sm:$0xff]
    %v102 = vld [vmem:[%s1 + $0x218] sm:$0xff]
    %v103 = vld [vmem:[%s1 + $0x220] sm:$0xff]
    %v104 = vld [vmem:[%s1 + $0x228] sm:$0xff]
    %v105 = vld [vmem:[%s1 + $0x230] sm:$0xff]
    %v106 = vld [vmem:[%s1 + $0x238] sm:$0xff]
    %v107 = vld [vmem:[%s1 + $0x240] sm:$0xff]
    %v108 = vld [vmem:[%s1 + $0x248] sm:$0xff]
    %v109 = vld [vmem:[%s1 + $0x250] sm:$0xff]
    %v110 = vld [vmem:[%s1 + $0x258] sm:$0xff]
    %v111 = vld [vmem:[%s1 + $0x260] sm:$0xff]
    %v112 = vld [vmem:[%s1 + $0x268] sm:$0xff]
    %v113 = vld [vmem:[%s1 + $0x270] sm:$0xff]
    %v114 = vld [vmem:[%s1 + $0x278] sm:$0xff]
    %v115 = vld [vmem:[%s1 + $0x280] sm:$0xff]
    %v116 = vld [vmem:[%s1 + $0x288] sm:$0xff]
    %v117 = vld [vmem:[%s1 + $0x290] sm:$0xff]
    %v118 = vld [vmem:[%s1 + $0x298] sm:$0xff]
    %v119 = vld [vmem:[%s1 + $0x2a0] sm:$0xff]
    %v120 = vld [vmem:[%s1 + $0x2a8] sm:$0xff]
    %v121 = vld [vmem:[%s1 + $0x2b0] sm:$0xff]
    %v122 = vld [vmem:[%s1 + $0x2b8] sm:$0xff]
    %v123 = vld [vmem:[%s1 + $0x2c0] sm:$0xff]
    %v124 = vld [vmem:[%s1 + $0x2c8] sm:$0xff]
    %v125 = vld [vmem:[%s1 + $0x2d0] sm:$0xff]
    %v126 = vld [vmem:[%s1 + $0x2d8] sm:$0xff]
    %v127 = vld [vmem:[%s1 + $0x2e0] sm:$0xff]
    %v128 = vld [vmem:[%s1 + $0x2e8] sm:$0xff]
    %v129 = vld [vmem:[%s1 + $0x2f0] sm:$0xff]
    %v130 = vld [vmem:[%s1 + $0x2f8] sm:$0xff]
    %v131 = vld [vmem:[%s1 + $0x300] sm:$0xff]
    %v132 = vld [vmem:[%s1 + $0x308] sm:$0xff]
    %v133 = vld [vmem:[%s1 + $0x310] sm:$0xff]
    %v134 = vld [vmem:[%s1 + $0x318] sm:$0xff]
    %v135 = vld [vmem:[%s1 + $0x320] sm:$0xff]
    %v136 = vld [vmem:[%s1 + $0x328] sm:$0xff]
    %v137 = vld [vmem:[%s1 + $0x330] sm:$0xff]
    %v138 = vld [vmem:[%s1 + $0x338] sm:$0xff]
    %v139 = vld [vmem:[%s1 + $0x340] sm:$0xff]
    %v140 = vld [vmem:[%s1 + $0x348] sm:$0xff]
    %v141 = vld [vmem:[%s1 + $0x350] sm:$0xff]
    %v142 = vld [vmem:[%s1 + $0x358] sm:$0xff]
    %v143 = vld [vmem:[%s1 + $0x360] sm:$0xff]
    %v144 = vld [vmem:[%s1 + $0x368] sm:$0xff]
    %v145 = vld [vmem:[%s1 + $0x370] sm:$0xff]
    %v146 = vld [vmem:[%s1 + $0x378] sm:$0xff]
    %v147 = vld [vmem:[%s1 + $0x380] sm:$0xff]
    %v148 = vld [vmem:[%s1 + $0x388] sm:$0xff]
    %v149 = vld [vmem:[%s1 + $0x390] sm:$0xff]
    %v150 = vld [vmem:[%s1 + $0x398] sm:$0xff]
    %v151 = vld [vmem:[%s1 + $0x3a0] sm:$0xff]
    %v152 = vld [vmem:[%s1 + $0x3a8] sm:$0xff]
    %v153 = vld [vmem:[%s1 + $0x3b0] sm:$0xff]
    %v154 = vld [vmem:[%s1 + $0x3b8] sm:$0xff]
    %v155 = vld [vmem:[%s1 + $0x3c0] sm:$0xff]
    %v156 = vld [vmem:[%s1 + $0x3c8] sm:$0xff]
    %v157 = vld [vmem:[%s1 + $0x3d0] sm:$0xff]
    %v158 = vld [vmem:[%s1 + $0x3d8] sm:$0xff]
    %v159 = vld [vmem:[%s1 + $0x3e0] sm:$0xff]
    %v160 = vld [vmem:[%s1 + $0x3e8] sm:$0xff]
    %v161 = vld [vmem:[%s1 + $0x3f0] sm:$0xff]
    %v162 = vld [vmem:[%s1 + $0x3f8] sm:$0xff]
    %v163 = vld [vmem:[%s2] sm:$0x1]
    %v165 = vlaneseq
    %v166 = vshrl.u32 %v165, 7
    %v167 = vsub.s32 0, %v166
    %v168 = vrot.slane %v163, %v167
    %170 = vmatprep.subr.mxu0 0.0
    %171 = vmatpush1.msra.mxu0 %v35
    %172 = vmatprep.subr.mxu0 0.0
    %173 = vmatpush1.msra.mxu0 %v36
    %174 = vmatprep.subr.mxu0 0.0
    %175 = vmatpush1.msra.mxu0 %v37
    %176 = vmatprep.subr.mxu0 0.0
    %177 = vmatpush1.msra.mxu0 %v38
    %178 = vmatprep.subr.mxu0 0.0
    %179 = vmatpush1.msra.mxu0 %v39
    %180 = vmatprep.subr.mxu0 0.0
    %181 = vmatpush1.msra.mxu0 %v40
    %182 = vmatprep.subr.mxu0 0.0
    %183 = vmatpush1.msra.mxu0 %v41
    %184 = vmatprep.subr.mxu0 0.0
    %185 = vmatpush1.msra.mxu0 %v42
    %186 = vmatprep.subr.mxu0 0.0
    %187 = vmatpush1.msra.mxu0 %v43
    %188 = vmatprep.subr.mxu0 0.0
    %189 = vmatpush1.msra.mxu0 %v44
    %190 = vmatprep.subr.mxu0 0.0
    %191 = vmatpush1.msra.mxu0 %v45
    %192 = vmatprep.subr.mxu0 0.0
    %193 = vmatpush1.msra.mxu0 %v46
    %194 = vmatprep.subr.mxu0 0.0
    %195 = vmatpush1.msra.mxu0 %v47
    %196 = vmatprep.subr.mxu0 0.0
    %197 = vmatpush1.msra.mxu0 %v48
    %198 = vmatprep.subr.mxu0 0.0
    %199 = vmatpush1.msra.mxu0 %v49
    %200 = vmatprep.subr.mxu0 0.0
    %201 = vmatpush1.msra.mxu0 %v50
    %202 = vmatprep.subr.mxu0 0.0
    %203 = vmatpush1.msra.mxu0 %v51
    %204 = vmatprep.subr.mxu0 0.0
    %205 = vmatpush1.msra.mxu0 %v52
    %206 = vmatprep.subr.mxu0 0.0
    %207 = vmatpush1.msra.mxu0 %v53
    %208 = vmatprep.subr.mxu0 0.0
    %209 = vmatpush1.msra.mxu0 %v54
    %210 = vmatprep.subr.mxu0 0.0
    %211 = vmatpush1.msra.mxu0 %v55
    %212 = vmatprep.subr.mxu0 0.0
    %213 = vmatpush1.msra.mxu0 %v56
    %214 = vmatprep.subr.mxu0 0.0
    %215 = vmatpush1.msra.mxu0 %v57
    %216 = vmatprep.subr.mxu0 0.0
    %217 = vmatpush1.msra.mxu0 %v58
    %218 = vmatprep.subr.mxu0 0.0
    %219 = vmatpush1.msra.mxu0 %v59
    %220 = vmatprep.subr.mxu0 0.0
    %221 = vmatpush1.msra.mxu0 %v60
    %222 = vmatprep.subr.mxu0 0.0
    %223 = vmatpush1.msra.mxu0 %v61
    %224 = vmatprep.subr.mxu0 0.0
    %225 = vmatpush1.msra.mxu0 %v62
    %226 = vmatprep.subr.mxu0 0.0
    %227 = vmatpush1.msra.mxu0 %v63
    %228 = vmatprep.subr.mxu0 0.0
    %229 = vmatpush1.msra.mxu0 %v64
    %230 = vmatprep.subr.mxu0 0.0
    %231 = vmatpush1.msra.mxu0 %v65
    %232 = vmatprep.subr.mxu0 0.0
    %233 = vmatpush1.msra.mxu0 %v66
    %234 = vmatprep.mubr.f32.mxu0 %v28
    %235 = vmatmul.mubr.f32.gmra.mrb[0].mxu0 %v27
    %v236 = vpop.f32.mrb[0].mxu0
    %v237 = vadd.f32 %v168, %v236
    %v238 = vpop.f32.mrb[0].mxu0
    %239 = vdwg.mxu0
    %240 = vmatprep.subr.mxu0 0.0
    %241 = vmatpush1.msra.mxu0 %v67
    %242 = vmatprep.subr.mxu0 0.0
    %243 = vmatpush1.msra.mxu0 %v68
    %244 = vmatprep.subr.mxu0 0.0
    %245 = vmatpush1.msra.mxu0 %v69
    %246 = vmatprep.subr.mxu0 0.0
    %247 = vmatpush1.msra.mxu0 %v70
    %248 = vmatprep.subr.mxu0 0.0
    %249 = vmatpush1.msra.mxu0 %v71
    %250 = vmatprep.subr.mxu0 0.0
    %251 = vmatpush1.msra.mxu0 %v72
    %252 = vmatprep.subr.mxu0 0.0
    %253 = vmatpush1.msra.mxu0 %v73
    %254 = vmatprep.subr.mxu0 0.0
    %255 = vmatpush1.msra.mxu0 %v74
    %256 = vmatprep.subr.mxu0 0.0
    %257 = vmatpush1.msra.mxu0 %v75
    %258 = vmatprep.subr.mxu0 0.0
    %259 = vmatpush1.msra.mxu0 %v76
    %260 = vmatprep.subr.mxu0 0.0
    %261 = vmatpush1.msra.mxu0 %v77
    %262 = vmatprep.subr.mxu0 0.0
    %263 = vmatpush1.msra.mxu0 %v78
    %264 = vmatprep.subr.mxu0 0.0
    %265 = vmatpush1.msra.mxu0 %v79
    %266 = vmatprep.subr.mxu0 0.0
    %267 = vmatpush1.msra.mxu0 %v80
    %268 = vmatprep.subr.mxu0 0.0
    %269 = vmatpush1.msra.mxu0 %v81
    %270 = vmatprep.subr.mxu0 0.0
    %271 = vmatpush1.msra.mxu0 %v82
    %272 = vmatprep.subr.mxu0 0.0
    %273 = vmatpush1.msra.mxu0 %v83
    %274 = vmatprep.subr.mxu0 0.0
    %275 = vmatpush1.msra.mxu0 %v84
    %276 = vmatprep.subr.mxu0 0.0
    %277 = vmatpush1.msra.mxu0 %v85
    %278 = vmatprep.subr.mxu0 0.0
    %279 = vmatpush1.msra.mxu0 %v86
    %280 = vmatprep.subr.mxu0 0.0
    %281 = vmatpush1.msra.mxu0 %v87
    %282 = vmatprep.subr.mxu0 0.0
    %283 = vmatpush1.msra.mxu0 %v88
    %284 = vmatprep.subr.mxu0 0.0
    %285 = vmatpush1.msra.mxu0 %v89
    %286 = vmatprep.subr.mxu0 0.0
    %287 = vmatpush1.msra.mxu0 %v90
    %288 = vmatprep.subr.mxu0 0.0
    %289 = vmatpush1.msra.mxu0 %v91
    %290 = vmatprep.subr.mxu0 0.0
    %291 = vmatpush1.msra.mxu0 %v92
    %292 = vmatprep.subr.mxu0 0.0
    %293 = vmatpush1.msra.mxu0 %v93
    %294 = vmatprep.subr.mxu0 0.0
    %295 = vmatpush1.msra.mxu0 %v94
    %296 = vmatprep.subr.mxu0 0.0
    %297 = vmatpush1.msra.mxu0 %v95
    %298 = vmatprep.subr.mxu0 0.0
    %299 = vmatpush1.msra.mxu0 %v96
    %300 = vmatprep.subr.mxu0 0.0
    %301 = vmatpush1.msra.mxu0 %v97
    %302 = vmatprep.subr.mxu0 0.0
    %303 = vmatpush1.msra.mxu0 %v98
    %304 = vmatprep.mubr.f32.mxu0 %v30
    %305 = vmatmul.mubr.f32.gmra.mrb[0].mxu0 %v29
    %v306 = vpop.f32.mrb[0].mxu0
    %v307 = vadd.f32 %v237, %v306
    %v308 = vpop.f32.mrb[0].mxu0
    %309 = vdwg.mxu0
    %310 = vmatprep.subr.mxu0 0.0
    %311 = vmatpush1.msra.mxu0 %v99
    %312 = vmatprep.subr.mxu0 0.0
    %313 = vmatpush1.msra.mxu0 %v100
    %314 = vmatprep.subr.mxu0 0.0
    %315 = vmatpush1.msra.mxu0 %v101
    %316 = vmatprep.subr.mxu0 0.0
    %317 = vmatpush1.msra.mxu0 %v102
    %318 = vmatprep.subr.mxu0 0.0
    %319 = vmatpush1.msra.mxu0 %v103
    %320 = vmatprep.subr.mxu0 0.0
    %321 = vmatpush1.msra.mxu0 %v104
    %322 = vmatprep.subr.mxu0 0.0
    %323 = vmatpush1.msra.mxu0 %v105
    %324 = vmatprep.subr.mxu0 0.0
    %325 = vmatpush1.msra.mxu0 %v106
    %326 = vmatprep.subr.mxu0 0.0
    %327 = vmatpush1.msra.mxu0 %v107
    %328 = vmatprep.subr.mxu0 0.0
    %329 = vmatpush1.msra.mxu0 %v108
    %330 = vmatprep.subr.mxu0 0.0
    %331 = vmatpush1.msra.mxu0 %v109
    %332 = vmatprep.subr.mxu0 0.0
    %333 = vmatpush1.msra.mxu0 %v110
    %334 = vmatprep.subr.mxu0 0.0
    %335 = vmatpush1.msra.mxu0 %v111
    %336 = vmatprep.subr.mxu0 0.0
    %337 = vmatpush1.msra.mxu0 %v112
    %338 = vmatprep.subr.mxu0 0.0
    %339 = vmatpush1.msra.mxu0 %v113
    %340 = vmatprep.subr.mxu0 0.0
    %341 = vmatpush1.msra.mxu0 %v114
    %342 = vmatprep.subr.mxu0 0.0
    %343 = vmatpush1.msra.mxu0 %v115
    %344 = vmatprep.subr.mxu0 0.0
    %345 = vmatpush1.msra.mxu0 %v116
    %346 = vmatprep.subr.mxu0 0.0
    %347 = vmatpush1.msra.mxu0 %v117
    %348 = vmatprep.subr.mxu0 0.0
    %349 = vmatpush1.msra.mxu0 %v118
    %350 = vmatprep.subr.mxu0 0.0
    %351 = vmatpush1.msra.mxu0 %v119
    %352 = vmatprep.subr.mxu0 0.0
    %353 = vmatpush1.msra.mxu0 %v120
    %354 = vmatprep.subr.mxu0 0.0
    %355 = vmatpush1.msra.mxu0 %v121
    %356 = vmatprep.subr.mxu0 0.0
    %357 = vmatpush1.msra.mxu0 %v122
    %358 = vmatprep.subr.mxu0 0.0
    %359 = vmatpush1.msra.mxu0 %v123
    %360 = vmatprep.subr.mxu0 0.0
    %361 = vmatpush1.msra.mxu0 %v124
    %362 = vmatprep.subr.mxu0 0.0
    %363 = vmatpush1.msra.mxu0 %v125
    %364 = vmatprep.subr.mxu0 0.0
    %365 = vmatpush1.msra.mxu0 %v126
    %366 = vmatprep.subr.mxu0 0.0
    %367 = vmatpush1.msra.mxu0 %v127
    %368 = vmatprep.subr.mxu0 0.0
    %369 = vmatpush1.msra.mxu0 %v128
    %370 = vmatprep.subr.mxu0 0.0
    %371 = vmatpush1.msra.mxu0 %v129
    %372 = vmatprep.subr.mxu0 0.0
    %373 = vmatpush1.msra.mxu0 %v130
    %374 = vmatprep.mubr.f32.mxu0 %v32
    %375 = vmatmul.mubr.f32.gmra.mrb[0].mxu0 %v31
    %v376 = vpop.f32.mrb[0].mxu0
    %v377 = vadd.f32 %v307, %v376
    %v378 = vpop.f32.mrb[0].mxu0
    %379 = vdwg.mxu0
    %380 = vmatprep.subr.mxu0 0.0
    %381 = vmatpush1.msra.mxu0 %v131
    %382 = vmatprep.subr.mxu0 0.0
    %383 = vmatpush1.msra.mxu0 %v132
    %384 = vmatprep.subr.mxu0 0.0
    %385 = vmatpush1.msra.mxu0 %v133
    %386 = vmatprep.subr.mxu0 0.0
    %387 = vmatpush1.msra.mxu0 %v134
    %388 = vmatprep.subr.mxu0 0.0
    %389 = vmatpush1.msra.mxu0 %v135
    %390 = vmatprep.subr.mxu0 0.0
    %391 = vmatpush1.msra.mxu0 %v136
    %392 = vmatprep.subr.mxu0 0.0
    %393 = vmatpush1.msra.mxu0 %v137
    %394 = vmatprep.subr.mxu0 0.0
    %395 = vmatpush1.msra.mxu0 %v138
    %396 = vmatprep.subr.mxu0 0.0
    %397 = vmatpush1.msra.mxu0 %v139
    %398 = vmatprep.subr.mxu0 0.0
    %399 = vmatpush1.msra.mxu0 %v140
    %400 = vmatprep.subr.mxu0 0.0
    %401 = vmatpush1.msra.mxu0 %v141
    %402 = vmatprep.subr.mxu0 0.0
    %403 = vmatpush1.msra.mxu0 %v142
    %404 = vmatprep.subr.mxu0 0.0
    %405 = vmatpush1.msra.mxu0 %v143
    %406 = vmatprep.subr.mxu0 0.0
    %407 = vmatpush1.msra.mxu0 %v144
    %408 = vmatprep.subr.mxu0 0.0
    %409 = vmatpush1.msra.mxu0 %v145
    %410 = vmatprep.subr.mxu0 0.0
    %411 = vmatpush1.msra.mxu0 %v146
    %412 = vmatprep.subr.mxu0 0.0
    %413 = vmatpush1.msra.mxu0 %v147
    %414 = vmatprep.subr.mxu0 0.0
    %415 = vmatpush1.msra.mxu0 %v148
    %416 = vmatprep.subr.mxu0 0.0
    %417 = vmatpush1.msra.mxu0 %v149
    %418 = vmatprep.subr.mxu0 0.0
    %419 = vmatpush1.msra.mxu0 %v150
    %420 = vmatprep.subr.mxu0 0.0
    %421 = vmatpush1.msra.mxu0 %v151
    %422 = vmatprep.subr.mxu0 0.0
    %423 = vmatpush1.msra.mxu0 %v152
    %424 = vmatprep.subr.mxu0 0.0
    %425 = vmatpush1.msra.mxu0 %v153
    %426 = vmatprep.subr.mxu0 0.0
    %427 = vmatpush1.msra.mxu0 %v154
    %428 = vmatprep.subr.mxu0 0.0
    %429 = vmatpush1.msra.mxu0 %v155
    %430 = vmatprep.subr.mxu0 0.0
    %431 = vmatpush1.msra.mxu0 %v156
    %432 = vmatprep.subr.mxu0 0.0
    %433 = vmatpush1.msra.mxu0 %v157
    %434 = vmatprep.subr.mxu0 0.0
    %435 = vmatpush1.msra.mxu0 %v158
    %436 = vmatprep.subr.mxu0 0.0
    %437 = vmatpush1.msra.mxu0 %v159
    %438 = vmatprep.subr.mxu0 0.0
    %439 = vmatpush1.msra.mxu0 %v160
    %440 = vmatprep.subr.mxu0 0.0
    %441 = vmatpush1.msra.mxu0 %v161
    %442 = vmatprep.subr.mxu0 0.0
    %443 = vmatpush1.msra.mxu0 %v162
    %444 = vmatprep.mubr.f32.mxu0 %v34
    %445 = vmatmul.mubr.f32.gmra.mrb[0].mxu0 %v33
    %v446 = vpop.f32.mrb[0].mxu0
    %v447 = vadd.f32 %v377, %v446
    %v448 = vpop.f32.mrb[0].mxu0
    %449 = vdwg.mxu0
    %v450 = vmul.f32 %v447, 0.03125
    %v451 = vmax.f32 %v450, 0.0
    %v452 = vld [vmem:[%s3] sm:$0xff]
    %v453 = vld [vmem:[%s3 + $0x8] sm:$0xff]
    %v454 = vld [vmem:[%s3 + $0x10] sm:$0xff]
    %v455 = vld [vmem:[%s3 + $0x18] sm:$0xff]
    %v456 = vld [vmem:[%s4] sm:$0x1]
    %v458 = vlaneseq
    %v459 = vshrl.u32 %v458, 7
    %v460 = vsub.s32 0, %v459
    %v461 = vrot.slane %v456, %v460
    %vm463 = vcmask 261120
    %v465 = vsel %vm463, %v451, 0
    %467 = vmatprep.subr.mxu0 0.0
    %468 = vmatpush1.msra.mxu0 %v452
    %469 = vmatprep.subr.mxu0 0.0
    %470 = vmatpush1.msra.mxu0 %v453
    %471 = vmatprep.subr.mxu0 0.0
    %472 = vmatpush1.msra.mxu0 %v454
    %473 = vmatprep.subr.mxu0 0.0
    %474 = vmatpush1.msra.mxu0 %v455
    %475 = vmatprep.subr.mxu0 0.0
    %476 = vmatpush1.msra.mxu0 0.0
    %477 = vmatprep.subr.mxu0 0.0
    %478 = vmatpush1.msra.mxu0 0.0
    %479 = vmatprep.subr.mxu0 0.0
    %480 = vmatpush1.msra.mxu0 0.0
    %481 = vmatprep.subr.mxu0 0.0
    %482 = vmatpush1.msra.mxu0 0.0
    %483 = vmatprep.subr.mxu0 0.0
    %484 = vmatpush1.msra.mxu0 0.0
    %485 = vmatprep.subr.mxu0 0.0
    %486 = vmatpush1.msra.mxu0 0.0
    %487 = vmatprep.subr.mxu0 0.0
    %488 = vmatpush1.msra.mxu0 0.0
    %489 = vmatprep.subr.mxu0 0.0
    %490 = vmatpush1.msra.mxu0 0.0
    %491 = vmatprep.subr.mxu0 0.0
    %492 = vmatpush1.msra.mxu0 0.0
    %493 = vmatprep.subr.mxu0 0.0
    %494 = vmatpush1.msra.mxu0 0.0
    %495 = vmatprep.subr.mxu0 0.0
    %496 = vmatpush1.msra.mxu0 0.0
    %497 = vmatprep.subr.mxu0 0.0
    %498 = vmatpush1.msra.mxu0 0.0
    %499 = vmatprep.subr.mxu0 0.0
    %500 = vmatpush1.msra.mxu0 0.0
    %501 = vmatprep.subr.mxu0 0.0
    %502 = vmatpush1.msra.mxu0 0.0
    %503 = vmatprep.subr.mxu0 0.0
    %504 = vmatpush1.msra.mxu0 0.0
    %505 = vmatprep.subr.mxu0 0.0
    %506 = vmatpush1.msra.mxu0 0.0
    %507 = vmatprep.subr.mxu0 0.0
    %508 = vmatpush1.msra.mxu0 0.0
    %509 = vmatprep.subr.mxu0 0.0
    %510 = vmatpush1.msra.mxu0 0.0
    %511 = vmatprep.subr.mxu0 0.0
    %512 = vmatpush1.msra.mxu0 0.0
    %513 = vmatprep.subr.mxu0 0.0
    %514 = vmatpush1.msra.mxu0 0.0
    %515 = vmatprep.subr.mxu0 0.0
    %516 = vmatpush1.msra.mxu0 0.0
    %517 = vmatprep.subr.mxu0 0.0
    %518 = vmatpush1.msra.mxu0 0.0
    %519 = vmatprep.subr.mxu0 0.0
    %520 = vmatpush1.msra.mxu0 0.0
    %521 = vmatprep.subr.mxu0 0.0
    %522 = vmatpush1.msra.mxu0 0.0
    %523 = vmatprep.subr.mxu0 0.0
    %524 = vmatpush1.msra.mxu0 0.0
    %525 = vmatprep.subr.mxu0 0.0
    %526 = vmatpush1.msra.mxu0 0.0
    %527 = vmatprep.subr.mxu0 0.0
    %528 = vmatpush1.msra.mxu0 0.0
    %529 = vmatprep.subr.mxu0 0.0
    %530 = vmatpush1.msra.mxu0 0.0
    %531 = vmatprep.mubr.f32.mxu0 0.0
    %532 = vmatmul.mubr.f32.gmra.mrb[0].mxu0 %v465
    %v533 = vpop.f32.mrb[0].mxu0
    %v534 = vadd.f32 %v461, %v533
    %v535 = vpop.f32.mrb[0].mxu0
    %536 = vdwg.mxu0
    %v537 = vmul.f32 %v534, 0.17677669
    %v538 = vmax.f32 %v537, 0.0
    %v539 = vld [vmem:[%s5] sm:$0xff]
    %v540 = vld [vmem:[%s5 + $0x8] sm:$0xff]
    %v541 = vld [vmem:[%s5 + $0x10] sm:$0xff]
    %v542 = vld [vmem:[%s5 + $0x18] sm:$0xff]
    %v543 = vld [vmem:[%s6] sm:$0x1]
    %v545 = vlaneseq
    %v546 = vshrl.u32 %v545, 7
    %v547 = vsub.s32 0, %v546
    %v548 = vrot.slane %v543, %v547
    %v551 = vsel %vm463, %v538, 0
    %553 = vmatprep.subr.mxu0 0.0
    %554 = vmatpush1.msra.mxu0 %v539
    %555 = vmatprep.subr.mxu0 0.0
    %556 = vmatpush1.msra.mxu0 %v540
    %557 = vmatprep.subr.mxu0 0.0
    %558 = vmatpush1.msra.mxu0 %v541
    %559 = vmatprep.subr.mxu0 0.0
    %560 = vmatpush1.msra.mxu0 %v542
    %561 = vmatprep.subr.mxu0 0.0
    %562 = vmatpush1.msra.mxu0 0.0
    %563 = vmatprep.subr.mxu0 0.0
    %564 = vmatpush1.msra.mxu0 0.0
    %565 = vmatprep.subr.mxu0 0.0
    %566 = vmatpush1.msra.mxu0 0.0
    %567 = vmatprep.subr.mxu0 0.0
    %568 = vmatpush1.msra.mxu0 0.0
    %569 = vmatprep.subr.mxu0 0.0
    %570 = vmatpush1.msra.mxu0 0.0
    %571 = vmatprep.subr.mxu0 0.0
    %572 = vmatpush1.msra.mxu0 0.0
    %573 = vmatprep.subr.mxu0 0.0
    %574 = vmatpush1.msra.mxu0 0.0
    %575 = vmatprep.subr.mxu0 0.0
    %576 = vmatpush1.msra.mxu0 0.0
    %577 = vmatprep.subr.mxu0 0.0
    %578 = vmatpush1.msra.mxu0 0.0
    %579 = vmatprep.subr.mxu0 0.0
    %580 = vmatpush1.msra.mxu0 0.0
    %581 = vmatprep.subr.mxu0 0.0
    %582 = vmatpush1.msra.mxu0 0.0
    %583 = vmatprep.subr.mxu0 0.0
    %584 = vmatpush1.msra.mxu0 0.0
    %585 = vmatprep.subr.mxu0 0.0
    %586 = vmatpush1.msra.mxu0 0.0
    %587 = vmatprep.subr.mxu0 0.0
    %588 = vmatpush1.msra.mxu0 0.0
    %589 = vmatprep.subr.mxu0 0.0
    %590 = vmatpush1.msra.mxu0 0.0
    %591 = vmatprep.subr.mxu0 0.0
    %592 = vmatpush1.msra.mxu0 0.0
    %593 = vmatprep.subr.mxu0 0.0
    %594 = vmatpush1.msra.mxu0 0.0
    %595 = vmatprep.subr.mxu0 0.0
    %596 = vmatpush1.msra.mxu0 0.0
    %597 = vmatprep.subr.mxu0 0.0
    %598 = vmatpush1.msra.mxu0 0.0
    %599 = vmatprep.subr.mxu0 0.0
    %600 = vmatpush1.msra.mxu0 0.0
    %601 = vmatprep.subr.mxu0 0.0
    %602 = vmatpush1.msra.mxu0 0.0
    %603 = vmatprep.subr.mxu0 0.0
    %604 = vmatpush1.msra.mxu0 0.0
    %605 = vmatprep.subr.mxu0 0.0
    %606 = vmatpush1.msra.mxu0 0.0
    %607 = vmatprep.subr.mxu0 0.0
    %608 = vmatpush1.msra.mxu0 0.0
    %609 = vmatprep.subr.mxu0 0.0
    %610 = vmatpush1.msra.mxu0 0.0
    %611 = vmatprep.subr.mxu0 0.0
    %612 = vmatpush1.msra.mxu0 0.0
    %613 = vmatprep.subr.mxu0 0.0
    %614 = vmatpush1.msra.mxu0 0.0
    %615 = vmatprep.subr.mxu0 0.0
    %616 = vmatpush1.msra.mxu0 0.0
    %617 = vmatprep.mubr.f32.mxu0 0.0
    %618 = vmatmul.mubr.f32.gmra.mrb[0].mxu0 %v551
    %v619 = vpop.f32.mrb[0].mxu0
    %v620 = vadd.f32 %v548, %v619
    %v621 = vpop.f32.mrb[0].mxu0
    %622 = vdwg.mxu0
    %v623 = vmul.f32 %v620, 0.03125
    %624 = vst [vmem:[#allocation2] sm:$0xff] %v623
    // Predicated region
    $region30: #{tpu_custom_call.1} parent=1 // pred_check
      _
    $region31: #{tpu_custom_call.1} parent=1 // pred_check_branch
      %626 = sbr.rel (0) target = $region33
    $region32: #{tpu_custom_call.1} parent=1 // pred_region
      %s628 = ssub.s32 128, 128
      %629 = vsyncadd [#allocation3], %s628
      %s631 = sshll.u32 [#allocation2], 4
      %s632 = int_to_ptr.vmem [resolvable:$true] %s631
      %634 = dma.vmem_to_hbm [thread:$0]  %s632, 128, %s7, [#allocation3]
    $region33: #{tpu_custom_call.1} parent=1 // pred_fallthru
      _
    // Predicated region
    $region34: #{tpu_custom_call.1} parent=1 // pred_check
      _
    $region35: #{tpu_custom_call.1} parent=1 // pred_check_branch
      %636 = sbr.rel (0) target = $region37
    $region36: #{tpu_custom_call.1} parent=1 // pred_region
      %637 = dma.done [#allocation3], 128
    $region37: #{tpu_custom_call.1} parent=1 // pred_fallthru
      _
    %638 = vsyncpa [#allocation3], 1

</llo_original>
